<compile_context>
chip_gen: v7x
topology: tpu7x:2x2x1
jax: 0.10.0
libtpu: 0.0.40
codegen_flags: <defaults>
</compile_context>

<pallas_src>
import jax
import jax.numpy as jnp
from jax.experimental import pallas as pl
from jax.experimental.pallas import tpu as pltpu

HIDDEN = 512
BN_EPS = 1e-5
N_PAD = 128    # lane-dense padded fc2 output width
LANE = 128     # lane width for K-dim padding


def _round_up(n, m):
    return ((n + m - 1) // m) * m


def classifier_kernel(x_ref, w1_ref, b1_ref, w2_ref, b2_ref, o_ref):
    """Fused fc1(+folded BN) -> ReLU -> fc2 on one batch tile.

    x_ref:  (TILE_B, K_pad)   bf16   (zero-padded past in_features)
    w1_ref: (K_pad, HIDDEN)   bf16   (BN scale folded in; zero-padded rows)
    b1_ref: (1, HIDDEN)       f32    (fc1 bias * scale + shift)
    w2_ref: (HIDDEN, N_PAD)   bf16   (zero-padded past num_classes)
    b2_ref: (1, N_PAD)        f32
    o_ref:  (TILE_B, N_PAD)   f32
    """
    # fc1 + BN: bf16 MXU matmul, f32 accumulation.
    h = jnp.dot(x_ref[...], w1_ref[...], preferred_element_type=jnp.float32)
    # f32 epilogue: bias + ReLU.
    h = jnp.maximum(h + b1_ref[...], 0.0)
    # Dropout: eval-mode identity.
    # TODO(synk): training-mode dropout would need pltpu.prng_seed /
    # pltpu.prng_random_bits keep-mask + 1/(1-p) rescale.
    out = jnp.dot(h.astype(jnp.bfloat16), w2_ref[...],
                  preferred_element_type=jnp.float32)
    o_ref[...] = (out + b2_ref[...]).astype(o_ref.dtype)


def prepare_params(params, num_classes):
    """One-time prep (outside the hot path): BN fold, transpose, bf16 cast,
    lane padding. Avoids per-call transposed weight copies in HBM."""
    in_features = params["fc1_w"].shape[1]
    k_pad = _round_up(in_features, LANE)

    inv_std = 1.0 / jnp.sqrt(params["bn_running_var"] + BN_EPS)
    scale = params["bn_gamma"] * inv_std                       # (HIDDEN,)
    shift = params["bn_beta"] - params["bn_running_mean"] * scale

    # fc1 weight (HIDDEN, in) -> (in, HIDDEN) with BN scale folded into
    # columns; rows zero-padded to k_pad so x's padded columns contribute 0.
    w1_f32 = jnp.zeros((k_pad, HIDDEN), jnp.float32)
    w1_f32 = w1_f32.at[:in_features, :].set(params["fc1_w"].T * scale[None, :])
    w1 = w1_f32.astype(jnp.bfloat16)
    # Folded bias: b1*scale + shift.
    b1 = ((params["fc1_b"] * scale + shift)[None, :]).astype(jnp.float32)

    # fc2 weight (C, HIDDEN) -> (HIDDEN, C), zero-padded to N_PAD lanes.
    w2_f32 = jnp.zeros((HIDDEN, N_PAD), jnp.float32)
    w2_f32 = w2_f32.at[:, :num_classes].set(params["fc2_w"].T.astype(jnp.float32))
    w2 = w2_f32.astype(jnp.bfloat16)
    b2 = jnp.zeros((1, N_PAD), jnp.float32)
    b2 = b2.at[0, :num_classes].set(params["fc2_b"].astype(jnp.float32))

    return {"w1": w1, "b1": b1, "w2": w2, "b2": b2, "k_pad": k_pad}


def custom_classifier_forward(x, prepared, num_classes):
    B, in_features = x.shape
    k_pad = prepared["k_pad"]

    # Batch tile: 256-row MXU-friendly tiles when the batch is large enough,
    # otherwise a single sublane-aligned tile. 256 x (k_pad bf16 + 128 f32)
    # double-buffered is well inside v7x's 64 MiB VMEM.
    TILE_B = 256 if B >= 256 else max(8, _round_up(B, 8))
    B_pad = _round_up(B, TILE_B)

    # Pad batch rows and feature columns (zeros) for tile/lane alignment.
    x_p = x.astype(jnp.bfloat16)
    if B_pad != B or k_pad != in_features:
        x_p = jnp.pad(x_p, ((0, B_pad - B), (0, k_pad - in_features)))

    w1, b1 = prepared["w1"], prepared["b1"]
    w2, b2 = prepared["w2"], prepared["b2"]

    grid = (B_pad // TILE_B,)

    flops = 2 * B_pad * (k_pad * HIDDEN + HIDDEN * N_PAD)
    bytes_accessed = (x_p.size * 2 + w1.size * 2 + w2.size * 2
                      + b1.size * 4 + b2.size * 4 + B_pad * N_PAD * 4)

    out = pl.pallas_call(
        classifier_kernel,
        out_shape=jax.ShapeDtypeStruct((B_pad, N_PAD), jnp.float32),
        grid=grid,
        in_specs=[
            pl.BlockSpec((TILE_B, k_pad), lambda i: (i, 0)),     # x tile
            pl.BlockSpec((k_pad, HIDDEN), lambda i: (0, 0)),     # w1 resident
            pl.BlockSpec((1, HIDDEN), lambda i: (0, 0)),         # b1 resident
            pl.BlockSpec((HIDDEN, N_PAD), lambda i: (0, 0)),     # w2 resident
            pl.BlockSpec((1, N_PAD), lambda i: (0, 0)),          # b2 resident
        ],
        out_specs=pl.BlockSpec((TILE_B, N_PAD), lambda i: (i, 0)),
        compiler_params=pltpu.CompilerParams(
            dimension_semantics=("parallel",),   # shards batch across v7x's 2 TCs
            vmem_limit_bytes=32 * 1024 * 1024,
        ),
        cost_estimate=pl.CostEstimate(
            flops=flops, transcendentals=0, bytes_accessed=bytes_accessed),
    )(x_p, w1, b1, w2, b2)

    return out[:B, :num_classes]


def init_params(key, in_features, num_classes):
    """Deterministic synthetic parameters matching the PyTorch module shapes."""
    ks = jax.random.split(key, 6)
    return {
        "fc1_w": jax.random.normal(ks[0], (HIDDEN, in_features), jnp.float32) * 0.05,
        "fc1_b": jax.random.normal(ks[1], (HIDDEN,), jnp.float32) * 0.01,
        "bn_gamma": jnp.ones((HIDDEN,), jnp.float32)
        + 0.1 * jax.random.normal(ks[2], (HIDDEN,), jnp.float32),
        "bn_beta": 0.1 * jax.random.normal(ks[3], (HIDDEN,), jnp.float32),
        "bn_running_mean": 0.05 * jax.random.normal(ks[2], (HIDDEN,), jnp.float32),
        "bn_running_var": jnp.ones((HIDDEN,), jnp.float32),
        "fc2_w": jax.random.normal(ks[4], (num_classes, HIDDEN), jnp.float32) * 0.05,
        "fc2_b": jax.random.normal(ks[5], (num_classes,), jnp.float32) * 0.01,
    }


if __name__ == "__main__":
    key = jax.random.PRNGKey(0)
    k_x, k_p = jax.random.split(key)

    batch = 8
    in_features = 32
    num_classes = 2

    x = jax.random.normal(k_x, (batch, in_features), jnp.float32)
    params = init_params(k_p, in_features, num_classes)

    prepared = prepare_params(params, num_classes)      # one-time prep
    out = custom_classifier_forward(x, prepared, num_classes)
    jax.block_until_ready(out)

    # Pure-JAX f32 reference (eval-mode BN, no dropout). Tolerance loosened
    # because the kernel uses bf16 matmul inputs (f32 accumulation).
    h = x @ params["fc1_w"].T + params["fc1_b"]
    inv_std = 1.0 / jnp.sqrt(params["bn_running_var"] + BN_EPS)
    h = (h - params["bn_running_mean"]) * inv_std * params["bn_gamma"] + params["bn_beta"]
    h = jnp.maximum(h, 0.0)
    ref = h @ params["fc2_w"].T + params["fc2_b"]

    assert out.shape == (batch, num_classes)
    assert jnp.allclose(out, ref, atol=3e-2, rtol=3e-2), (
        f"max abs err = {jnp.max(jnp.abs(out - ref))}")

    print("KERNEL_OK")
</pallas_src>

<mosaic_0001>
module attributes {stable_mosaic.version = 11 : i64} {
  func.func @classifier_kernel(%arg0: i32, %arg1: memref<8x128xbf16, #tpu.memory_space<vmem>>, %arg2: memref<128x512xbf16, #tpu.memory_space<vmem>>, %arg3: memref<1x512xf32, #tpu.memory_space<vmem>>, %arg4: memref<512x128xbf16, #tpu.memory_space<vmem>>, %arg5: memref<1x128xf32, #tpu.memory_space<vmem>>, %arg6: memref<8x128xf32, #tpu.memory_space<vmem>>) attributes {dimension_semantics = [#tpu.dimension_semantics<parallel>], iteration_bounds = array<i64: 1>, scalar_prefetch = 0 : i64, scratch_operands = 0 : i64, tpu.core_type = #tpu.core_type<tc>, window_params = [{transform_indices = @transform_0, window_bounds = array<i64: 8, 128>}, {pipeline_mode = #tpu.pipeline_mode<synchronous>, transform_indices = @transform_1, window_bounds = array<i64: 128, 512>}, {pipeline_mode = #tpu.pipeline_mode<synchronous>, transform_indices = @transform_2, window_bounds = array<i64: 1, 512>}, {pipeline_mode = #tpu.pipeline_mode<synchronous>, transform_indices = @transform_3, window_bounds = array<i64: 512, 128>}, {pipeline_mode = #tpu.pipeline_mode<synchronous>, transform_indices = @transform_4, window_bounds = array<i64: 1, 128>}, {transform_indices = @transform_5, window_bounds = array<i64: 8, 128>}]} {
    %c0 = arith.constant 0 : index
    %c0_0 = arith.constant 0 : index
    %0 = vector.load %arg1[%c0, %c0_0] : memref<8x128xbf16, #tpu.memory_space<vmem>>, vector<8x128xbf16>
    %c0_1 = arith.constant 0 : index
    %c0_2 = arith.constant 0 : index
    %1 = vector.load %arg2[%c0_1, %c0_2] : memref<128x512xbf16, #tpu.memory_space<vmem>>, vector<128x512xbf16>
    %cst = arith.constant dense<0.000000e+00> : vector<8x512xf32>
    %2 = tpu.matmul %0, %1, %cst {dimension_numbers = #tpu.dot_dimension_numbers<[1], [0], [0], [1], [0, 0, 1, 1], [], []>} : vector<8x128xbf16>, vector<128x512xbf16>, vector<8x512xf32> -> vector<8x512xf32>
    %c0_3 = arith.constant 0 : index
    %c0_4 = arith.constant 0 : index
    %3 = vector.load %arg3[%c0_3, %c0_4] : memref<1x512xf32, #tpu.memory_space<vmem>>, vector<1x512xf32>
    %4 = vector.broadcast %3 : vector<1x512xf32> to vector<8x512xf32>
    %5 = arith.addf %2, %4 : vector<8x512xf32>
    %cst_5 = arith.constant 0.000000e+00 : f32
    %6 = vector.broadcast %cst_5 : f32 to vector<8x512xf32>
    %7 = arith.maximumf %5, %6 : vector<8x512xf32>
    %8 = arith.truncf %7 : vector<8x512xf32> to vector<8x512xbf16>
    %c0_6 = arith.constant 0 : index
    %c0_7 = arith.constant 0 : index
    %9 = vector.load %arg4[%c0_6, %c0_7] : memref<512x128xbf16, #tpu.memory_space<vmem>>, vector<512x128xbf16>
    %cst_8 = arith.constant dense<0.000000e+00> : vector<8x128xf32>
    %10 = tpu.matmul %8, %9, %cst_8 {dimension_numbers = #tpu.dot_dimension_numbers<[1], [0], [0], [1], [0, 0, 1, 1], [], []>} : vector<8x512xbf16>, vector<512x128xbf16>, vector<8x128xf32> -> vector<8x128xf32>
    %c0_9 = arith.constant 0 : index
    %c0_10 = arith.constant 0 : index
    %11 = vector.load %arg5[%c0_9, %c0_10] : memref<1x128xf32, #tpu.memory_space<vmem>>, vector<1x128xf32>
    %12 = vector.broadcast %11 : vector<1x128xf32> to vector<8x128xf32>
    %13 = arith.addf %10, %12 : vector<8x128xf32>
    %c0_11 = arith.constant 0 : index
    %c0_12 = arith.constant 0 : index
    %14 = vector.load %arg6[%c0_11, %c0_12] : memref<8x128xf32, #tpu.memory_space<vmem>>, vector<8x128xf32>
    tpu.vector_store %arg6[%c0_11, %c0_12], %13 {strides = array<i32>} : memref<8x128xf32, #tpu.memory_space<vmem>>, vector<8x128xf32>,
    return
  }
  func.func @transform_0(%arg0: i32) -> (i32, i32) {
    %c0_i32 = arith.constant 0 : i32
    %c0_i32_0 = arith.constant 0 : i32
    return %arg0, %c0_i32 : i32, i32
  }
  func.func @transform_1(%arg0: i32) -> (i32, i32) {
    %c0_i32 = arith.constant 0 : i32
    %c0_i32_0 = arith.constant 0 : i32
    %c0_i32_1 = arith.constant 0 : i32
    return %c0_i32, %c0_i32_0 : i32, i32
  }
  func.func @transform_2(%arg0: i32) -> (i32, i32) {
    %c0_i32 = arith.constant 0 : i32
    %c0_i32_0 = arith.constant 0 : i32
    %c0_i32_1 = arith.constant 0 : i32
    return %c0_i32, %c0_i32_0 : i32, i32
  }
  func.func @transform_3(%arg0: i32) -> (i32, i32) {
    %c0_i32 = arith.constant 0 : i32
    %c0_i32_0 = arith.constant 0 : i32
    %c0_i32_1 = arith.constant 0 : i32
    return %c0_i32, %c0_i32_0 : i32, i32
  }
  func.func @transform_4(%arg0: i32) -> (i32, i32) {
    %c0_i32 = arith.constant 0 : i32
    %c0_i32_0 = arith.constant 0 : i32
    %c0_i32_1 = arith.constant 0 : i32
    return %c0_i32, %c0_i32_0 : i32, i32
  }
  func.func @transform_5(%arg0: i32) -> (i32, i32) {
    %c0_i32 = arith.constant 0 : i32
    %c0_i32_0 = arith.constant 0 : i32
    return %arg0, %c0_i32 : i32, i32
  }
}

</mosaic_0001>

<llo_original>
// kernel: tpu_custom_call.1
$region0: #{tpu_custom_call.1}
  #allocation0 [shape = 'u32[]', space=smem, size = 0x4, offset = 0x4, fixed_abs, tag = 'smem constant byte address 0x4 - core index']
  #allocation1 [shape = 'u32[144,128]{1,0:T(1,128)}', space=vmem, size = 0x12000, scoped, tag = 'internal scratch']
  %s0 = inlined_call_operand.hbm [shape: bf16[8,128], index: 0, kind: input, shape index: {}]
  %s1 = inlined_call_operand.hbm [shape: bf16[128,512], index: 1, kind: input, shape index: {}]
  %s2 = inlined_call_operand.vmem [shape: f32[1,512], index: 2, kind: input, shape index: {}]
  %s3 = inlined_call_operand.hbm [shape: bf16[512,128], index: 3, kind: input, shape index: {}]
  %s4 = inlined_call_operand.vmem [shape: f32[1,128], index: 4, kind: input, shape index: {}]
  %s5 = inlined_call_operand.hbm [shape: f32[8,128], index: 5, kind: output, shape index: {}]
  %s6 = sld [smem:[#allocation0]]
  $region42: #{tpu_custom_call.1} parent=0
    _
  %s8 = ssub.s32 1, %s6
  %s9 = scalar_select 0, %s8, %s6
  $region1: #{tpu_custom_call.1} parent=0
    #allocation2 [shape = 'u8[2048]{0}', space=vmem, size = 0x800, scoped, tag = 'input window, operand 0, single buffered']
    #allocation3 [shape = 's32[1]{0}', space=sflag, size = 0x4, scoped, tag = 'scoped memory for tpu_custom_call.1']
    #allocation4 [shape = 's32[1]{0}', space=sflag, size = 0x4, scoped, tag = 'scoped memory for tpu_custom_call.1']
    #allocation5 [shape = 'u8[131072]{0}', space=vmem, size = 0x20000, scoped, tag = 'input window, operand 1, single buffered']
    #allocation6 [shape = 's32[1]{0}', space=sflag, size = 0x4, scoped, tag = 'scoped memory for tpu_custom_call.1']
    #allocation7 [shape = 'u8[131072]{0}', space=vmem, size = 0x20000, scoped, tag = 'input window, operand 3, single buffered']
    #allocation8 [shape = 'u8[4096]{0}', space=vmem, size = 0x1000, scoped, tag = 'output window, operand 0, single buffered']
    %10 = vsyncpa [#allocation3], 0
    %11 = vsyncpa [#allocation6], 0
    %12 = vsyncpa [#allocation4], 0
    // Predicated region
    $region2: #{tpu_custom_call.1} parent=1 // pred_check
      _
    $region3: #{tpu_custom_call.1} parent=1 // pred_check_branch
      %14 = sbr.rel (0) target = $region5
    $region4: #{tpu_custom_call.1} parent=1 // pred_region
      %s16 = ssub.s32 64, 64
      %17 = vsyncadd [#allocation3], %s16
      %s19 = sshll.u32 [#allocation2], 4
      %s20 = int_to_ptr.vmem [resolvable:$true] %s19
      %22 = dma.hbm_to_vmem [thread:$0]  %s0, 64, %s20, [#allocation3]
    $region5: #{tpu_custom_call.1} parent=1 // pred_fallthru
      _
    // Predicated region
    $region6: #{tpu_custom_call.1} parent=1 // pred_check
      _
    $region7: #{tpu_custom_call.1} parent=1 // pred_check_branch
      %24 = sbr.rel (0) target = $region9
    $region8: #{tpu_custom_call.1} parent=1 // pred_region
      %s26 = ssub.s32 4096, 4096
      %27 = vsyncadd [#allocation6], %s26
      %s28 = sshll.u32 [#allocation5], 4
      %s29 = int_to_ptr.vmem [resolvable:$true] %s28
      %34 = dma.hbm_to_vmem [thread:$0]  %s1, 4096, %s29, [#allocation6], 256, 256, 16
    $region9: #{tpu_custom_call.1} parent=1 // pred_fallthru
      _
    // Predicated region
    $region10: #{tpu_custom_call.1} parent=1 // pred_check
      _
    $region11: #{tpu_custom_call.1} parent=1 // pred_check_branch
      %36 = sbr.rel (0) target = $region13
    $region12: #{tpu_custom_call.1} parent=1 // pred_region
      _
    $region13: #{tpu_custom_call.1} parent=1 // pred_fallthru
      _
    // Predicated region
    $region14: #{tpu_custom_call.1} parent=1 // pred_check
      _
    $region15: #{tpu_custom_call.1} parent=1 // pred_check_branch
      %38 = sbr.rel (0) target = $region17
    $region16: #{tpu_custom_call.1} parent=1 // pred_region
      %s40 = ssub.s32 4096, 4096
      %41 = vsyncadd [#allocation6], %s40
      %s42 = sshll.u32 [#allocation7], 4
      %s43 = int_to_ptr.vmem [resolvable:$true] %s42
      %48 = dma.hbm_to_vmem [thread:$0]  %s3, 4096, %s43, [#allocation6], 64, 64, 4
    $region17: #{tpu_custom_call.1} parent=1 // pred_fallthru
      _
    // Predicated region
    $region18: #{tpu_custom_call.1} parent=1 // pred_check
      _
    $region19: #{tpu_custom_call.1} parent=1 // pred_check_branch
      %50 = sbr.rel (0) target = $region21
    $region20: #{tpu_custom_call.1} parent=1 // pred_region
      _
    $region21: #{tpu_custom_call.1} parent=1 // pred_fallthru
      _
    // Predicated region
    $region22: #{tpu_custom_call.1} parent=1 // pred_check
      _
    $region23: #{tpu_custom_call.1} parent=1 // pred_check_branch
      %52 = sbr.rel (0) target = $region25
    $region24: #{tpu_custom_call.1} parent=1 // pred_region
      %53 = dma.done [#allocation3], 64
    $region25: #{tpu_custom_call.1} parent=1 // pred_fallthru
      _
    // Predicated region
    $region26: #{tpu_custom_call.1} parent=1 // pred_check
      _
    $region27: #{tpu_custom_call.1} parent=1 // pred_check_branch
      %55 = sbr.rel (0) target = $region29
    $region28: #{tpu_custom_call.1} parent=1 // pred_region
      %56 = dma.done [#allocation6], 4096
    $region29: #{tpu_custom_call.1} parent=1 // pred_fallthru
      _
    // Predicated region
    $region30: #{tpu_custom_call.1} parent=1 // pred_check
      _
    $region31: #{tpu_custom_call.1} parent=1 // pred_check_branch
      %58 = sbr.rel (0) target = $region33
    $region32: #{tpu_custom_call.1} parent=1 // pred_region
      %59 = dma.done [#allocation6], 4096
    $region33: #{tpu_custom_call.1} parent=1 // pred_fallthru
      _
    %v61 = vld [vmem:[#allocation2] sm:$0xf]
    %v62 = vld [vmem:[#allocation5] sm:$0xff]
    %v63 = vld [vmem:[#allocation5 + $0x8] sm:$0xff]
    %v64 = vld [vmem:[#allocation5 + $0x10] sm:$0xff]
    %v65 = vld [vmem:[#allocation5 + $0x18] sm:$0xff]
    %v66 = vld [vmem:[#allocation5 + $0x20] sm:$0xff]
    %v67 = vld [vmem:[#allocation5 + $0x28] sm:$0xff]
    %v68 = vld [vmem:[#allocation5 + $0x30] sm:$0xff]
    %v69 = vld [vmem:[#allocation5 + $0x38] sm:$0xff]
    %v70 = vld [vmem:[#allocation5 + $0x40] sm:$0xff]
    %v71 = vld [vmem:[#allocation5 + $0x48] sm:$0xff]
    %v72 = vld [vmem:[#allocation5 + $0x50] sm:$0xff]
    %v73 = vld [vmem:[#allocation5 + $0x58] sm:$0xff]
    %v74 = vld [vmem:[#allocation5 + $0x60] sm:$0xff]
    %v75 = vld [vmem:[#allocation5 + $0x68] sm:$0xff]
    %v76 = vld [vmem:[#allocation5 + $0x70] sm:$0xff]
    %v77 = vld [vmem:[#allocation5 + $0x78] sm:$0xff]
    %v78 = vld [vmem:[#allocation5 + $0x80] sm:$0xff]
    %v79 = vld [vmem:[#allocation5 + $0x88] sm:$0xff]
    %v80 = vld [vmem:[#allocation5 + $0x90] sm:$0xff]
    %v81 = vld [vmem:[#allocation5 + $0x98] sm:$0xff]
    %v82 = vld [vmem:[#allocation5 + $0xa0] sm:$0xff]
    %v83 = vld [vmem:[#allocation5 + $0xa8] sm:$0xff]
    %v84 = vld [vmem:[#allocation5 + $0xb0] sm:$0xff]
    %v85 = vld [vmem:[#allocation5 + $0xb8] sm:$0xff]
    %v86 = vld [vmem:[#allocation5 + $0xc0] sm:$0xff]
    %v87 = vld [vmem:[#allocation5 + $0xc8] sm:$0xff]
    %v88 = vld [vmem:[#allocation5 + $0xd0] sm:$0xff]
    %v89 = vld [vmem:[#allocation5 + $0xd8] sm:$0xff]
    %v90 = vld [vmem:[#allocation5 + $0xe0] sm:$0xff]
    %v91 = vld [vmem:[#allocation5 + $0xe8] sm:$0xff]
    %v92 = vld [vmem:[#allocation5 + $0xf0] sm:$0xff]
    %v93 = vld [vmem:[#allocation5 + $0xf8] sm:$0xff]
    %v94 = vld [vmem:[%s2] sm:$0xf]
    %v96 = vlaneseq
    %v97 = vshrl.u32 %v96, 7
    %v98 = vsub.s32 0, %v97
    %v99 = vrot.slane %v94, %v98
    %v100 = vlaneseq
    %v101 = vshrl.u32 %v100, 7
    %v102 = vsub.s32 1, %v101
    %v103 = vrot.slane %v94, %v102
    %v104 = vlaneseq
    %v105 = vshrl.u32 %v104, 7
    %v106 = vsub.s32 2, %v105
    %v107 = vrot.slane %v94, %v106
    %v108 = vlaneseq
    %v109 = vshrl.u32 %v108, 7
    %v110 = vsub.s32 3, %v109
    %v111 = vrot.slane %v94, %v110
    %v148 = vunpack.c.l.b16 %v62
    %v149 = vunpack.c.h.b16 %v62
    %v150 = vunpack.c.l.b16 %v63
    %v151 = vunpack.c.h.b16 %v63
    %v152 = vunpack.c.l.b16 %v64
    %v153 = vunpack.c.h.b16 %v64
    %v154 = vunpack.c.l.b16 %v65
    %v155 = vunpack.c.h.b16 %v65
    %v156 = vunpack.c.l.b16 %v66
    %v157 = vunpack.c.h.b16 %v66
    %v158 = vunpack.c.l.b16 %v67
    %v159 = vunpack.c.h.b16 %v67
    %v160 = vunpack.c.l.b16 %v68
    %v161 = vunpack.c.h.b16 %v68
    %v162 = vunpack.c.l.b16 %v69
    %v163 = vunpack.c.h.b16 %v69
    %v164 = vunpack.c.l.b16 %v70
    %v165 = vunpack.c.h.b16 %v70
    %v166 = vunpack.c.l.b16 %v71
    %v167 = vunpack.c.h.b16 %v71
    %v168 = vunpack.c.l.b16 %v72
    %v169 = vunpack.c.h.b16 %v72
    %v170 = vunpack.c.l.b16 %v73
    %v171 = vunpack.c.h.b16 %v73
    %v172 = vunpack.c.l.b16 %v74
    %v173 = vunpack.c.h.b16 %v74
    %v174 = vunpack.c.l.b16 %v75
    %v175 = vunpack.c.h.b16 %v75
    %v176 = vunpack.c.l.b16 %v76
    %v177 = vunpack.c.h.b16 %v76
    %v178 = vunpack.c.l.b16 %v77
    %v179 = vunpack.c.h.b16 %v77
    %v180 = vunpack.c.l.b16 %v78
    %v181 = vunpack.c.h.b16 %v78
    %v182 = vunpack.c.l.b16 %v79
    %v183 = vunpack.c.h.b16 %v79
    %v184 = vunpack.c.l.b16 %v80
    %v185 = vunpack.c.h.b16 %v80
    %v186 = vunpack.c.l.b16 %v81
    %v187 = vunpack.c.h.b16 %v81
    %v188 = vunpack.c.l.b16 %v82
    %v189 = vunpack.c.h.b16 %v82
    %v190 = vunpack.c.l.b16 %v83
    %v191 = vunpack.c.h.b16 %v83
    %v192 = vunpack.c.l.b16 %v84
    %v193 = vunpack.c.h.b16 %v84
    %v194 = vunpack.c.l.b16 %v85
    %v195 = vunpack.c.h.b16 %v85
    %v196 = vunpack.c.l.b16 %v86
    %v197 = vunpack.c.h.b16 %v86
    %v198 = vunpack.c.l.b16 %v87
    %v199 = vunpack.c.h.b16 %v87
    %v200 = vunpack.c.l.b16 %v88
    %v201 = vunpack.c.h.b16 %v88
    %v202 = vunpack.c.l.b16 %v89
    %v203 = vunpack.c.h.b16 %v89
    %v204 = vunpack.c.l.b16 %v90
    %v205 = vunpack.c.h.b16 %v90
    %v206 = vunpack.c.l.b16 %v91
    %v207 = vunpack.c.h.b16 %v91
    %v208 = vunpack.c.l.b16 %v92
    %v209 = vunpack.c.h.b16 %v92
    %v210 = vunpack.c.l.b16 %v93
    %v211 = vunpack.c.h.b16 %v93
    %v212 = vpack.c.b16 %v152, %v148
    %v213 = vpack.c.b16 %v153, %v149
    %v214 = vpack.c.b16 %v154, %v150
    %v215 = vpack.c.b16 %v155, %v151
    %v216 = vpack.c.b16 %v160, %v156
    %v217 = vpack.c.b16 %v161, %v157
    %v218 = vpack.c.b16 %v162, %v158
    %v219 = vpack.c.b16 %v163, %v159
    %v220 = vpack.c.b16 %v168, %v164
    %v221 = vpack.c.b16 %v169, %v165
    %v222 = vpack.c.b16 %v170, %v166
    %v223 = vpack.c.b16 %v171, %v167
    %v224 = vpack.c.b16 %v176, %v172
    %v225 = vpack.c.b16 %v177, %v173
    %v226 = vpack.c.b16 %v178, %v174
    %v227 = vpack.c.b16 %v179, %v175
    %v228 = vpack.c.b16 %v184, %v180
    %v229 = vpack.c.b16 %v185, %v181
    %v230 = vpack.c.b16 %v186, %v182
    %v231 = vpack.c.b16 %v187, %v183
    %v232 = vpack.c.b16 %v192, %v188
    %v233 = vpack.c.b16 %v193, %v189
    %v234 = vpack.c.b16 %v194, %v190
    %v235 = vpack.c.b16 %v195, %v191
    %v236 = vpack.c.b16 %v200, %v196
    %v237 = vpack.c.b16 %v201, %v197
    %v238 = vpack.c.b16 %v202, %v198
    %v239 = vpack.c.b16 %v203, %v199
    %v240 = vpack.c.b16 %v208, %v204
    %v241 = vpack.c.b16 %v209, %v205
    %v242 = vpack.c.b16 %v210, %v206
    %v243 = vpack.c.b16 %v211, %v207
    %276 = vmatprep.subr.bf16.mxu0 %v213
    %277 = vmatpush1.bf16.msra.mxu0 %v212
    %278 = vmatprep.subr.bf16.mxu0 %v217
    %279 = vmatpush1.bf16.msra.mxu0 %v216
    %280 = vmatprep.subr.bf16.mxu0 %v221
    %281 = vmatpush1.bf16.msra.mxu0 %v220
    %282 = vmatprep.subr.bf16.mxu0 %v225
    %283 = vmatpush1.bf16.msra.mxu0 %v224
    %284 = vmatprep.subr.bf16.mxu0 %v229
    %285 = vmatpush1.bf16.msra.mxu0 %v228
    %286 = vmatprep.subr.bf16.mxu0 %v233
    %287 = vmatpush1.bf16.msra.mxu0 %v232
    %288 = vmatprep.subr.bf16.mxu0 %v237
    %289 = vmatpush1.bf16.msra.mxu0 %v236
    %290 = vmatprep.subr.bf16.mxu0 %v241
    %291 = vmatpush1.bf16.msra.mxu0 %v240
    %292 = vmatprep.subr.bf16.mxu0 0
    %293 = vmatpush1.bf16.msra.mxu0 0
    %294 = vmatprep.subr.bf16.mxu0 0
    %295 = vmatpush1.bf16.msra.mxu0 0
    %296 = vmatprep.subr.bf16.mxu0 0
    %297 = vmatpush1.bf16.msra.mxu0 0
    %298 = vmatprep.subr.bf16.mxu0 0
    %299 = vmatpush1.bf16.msra.mxu0 0
    %300 = vmatprep.subr.bf16.mxu0 0
    %301 = vmatpush1.bf16.msra.mxu0 0
    %302 = vmatprep.subr.bf16.mxu0 0
    %303 = vmatpush1.bf16.msra.mxu0 0
    %304 = vmatprep.subr.bf16.mxu0 0
    %305 = vmatpush1.bf16.msra.mxu0 0
    %306 = vmatprep.subr.bf16.mxu0 0
    %307 = vmatpush1.bf16.msra.mxu0 0
    %308 = vmatprep.mubr.bf16.mxu0 0
    %309 = vmatmul.mubr.bf16.gmra.mrb[0].mxu0 %v61
    %v310 = vpop.f32.mrb[0].mxu0
    %v311 = vadd.f32 %v99, %v310
    %v312 = vpop.f32.mrb[0].mxu0
    %v313 = vadd.f32 %v103, %v312
    %v314 = vpop.f32.mrb[0].mxu0
    %v315 = vpop.f32.mrb[0].mxu0
    %316 = vdwg.mxu0
    %317 = vmatprep.subr.bf16.mxu0 %v215
    %318 = vmatpush1.bf16.msra.mxu0 %v214
    %319 = vmatprep.subr.bf16.mxu0 %v219
    %320 = vmatpush1.bf16.msra.mxu0 %v218
    %321 = vmatprep.subr.bf16.mxu0 %v223
    %322 = vmatpush1.bf16.msra.mxu0 %v222
    %323 = vmatprep.subr.bf16.mxu0 %v227
    %324 = vmatpush1.bf16.msra.mxu0 %v226
    %325 = vmatprep.subr.bf16.mxu0 %v231
    %326 = vmatpush1.bf16.msra.mxu0 %v230
    %327 = vmatprep.subr.bf16.mxu0 %v235
    %328 = vmatpush1.bf16.msra.mxu0 %v234
    %329 = vmatprep.subr.bf16.mxu0 %v239
    %330 = vmatpush1.bf16.msra.mxu0 %v238
    %331 = vmatprep.subr.bf16.mxu0 %v243
    %332 = vmatpush1.bf16.msra.mxu0 %v242
    %333 = vmatprep.subr.bf16.mxu0 0
    %334 = vmatpush1.bf16.msra.mxu0 0
    %335 = vmatprep.subr.bf16.mxu0 0
    %336 = vmatpush1.bf16.msra.mxu0 0
    %337 = vmatprep.subr.bf16.mxu0 0
    %338 = vmatpush1.bf16.msra.mxu0 0
    %339 = vmatprep.subr.bf16.mxu0 0
    %340 = vmatpush1.bf16.msra.mxu0 0
    %341 = vmatprep.subr.bf16.mxu0 0
    %342 = vmatpush1.bf16.msra.mxu0 0
    %343 = vmatprep.subr.bf16.mxu0 0
    %344 = vmatpush1.bf16.msra.mxu0 0
    %345 = vmatprep.subr.bf16.mxu0 0
    %346 = vmatpush1.bf16.msra.mxu0 0
    %347 = vmatprep.subr.bf16.mxu0 0
    %348 = vmatpush1.bf16.msra.mxu0 0
    %349 = vmatprep.mubr.bf16.mxu0 0
    %350 = vmatmul.mubr.bf16.gmra.mrb[0].mxu0 %v61
    %v351 = vpop.f32.mrb[0].mxu0
    %v352 = vadd.f32 %v107, %v351
    %v353 = vpop.f32.mrb[0].mxu0
    %v354 = vadd.f32 %v111, %v353
    %v355 = vpop.f32.mrb[0].mxu0
    %v356 = vpop.f32.mrb[0].mxu0
    %357 = vdwg.mxu0
    %v358 = vmax.f32 %v311, 0.0
    %v359 = vmax.f32 %v313, 0.0
    %v360 = vmax.f32 %v352, 0.0
    %v361 = vmax.f32 %v354, 0.0
    %v362 = vpack.c.bf16 %v358, %v358
    %v363 = vpack.c.bf16 %v359, %v359
    %v364 = vpack.c.bf16 %v360, %v360
    %v365 = vpack.c.bf16 %v361, %v361
    %v366 = vld [vmem:[#allocation7] sm:$0xf]
    %v367 = vld [vmem:[#allocation7 + $0x4] sm:$0xf]
    %v368 = vld [vmem:[#allocation7 + $0x8] sm:$0xf]
    %v369 = vld [vmem:[#allocation7 + $0xc] sm:$0xf]
    %v370 = vld [vmem:[#allocation7 + $0x10] sm:$0xf]
    %v371 = vld [vmem:[#allocation7 + $0x14] sm:$0xf]
    %v372 = vld [vmem:[#allocation7 + $0x18] sm:$0xf]
    %v373 = vld [vmem:[#allocation7 + $0x1c] sm:$0xf]
    %v374 = vld [vmem:[#allocation7 + $0x20] sm:$0xf]
    %v375 = vld [vmem:[#allocation7 + $0x24] sm:$0xf]
    %v376 = vld [vmem:[#allocation7 + $0x28] sm:$0xf]
    %v377 = vld [vmem:[#allocation7 + $0x2c] sm:$0xf]
    %v378 = vld [vmem:[#allocation7 + $0x30] sm:$0xf]
    %v379 = vld [vmem:[#allocation7 + $0x34] sm:$0xf]
    %v380 = vld [vmem:[#allocation7 + $0x38] sm:$0xf]
    %v381 = vld [vmem:[#allocation7 + $0x3c] sm:$0xf]
    %v382 = vld [vmem:[#allocation7 + $0x40] sm:$0xf]
    %v383 = vld [vmem:[#allocation7 + $0x44] sm:$0xf]
    %v384 = vld [vmem:[#allocation7 + $0x48] sm:$0xf]
    %v385 = vld [vmem:[#allocation7 + $0x4c] sm:$0xf]
    %v386 = vld [vmem:[#allocation7 + $0x50] sm:$0xf]
    %v387 = vld [vmem:[#allocation7 + $0x54] sm:$0xf]
    %v388 = vld [vmem:[#allocation7 + $0x58] sm:$0xf]
    %v389 = vld [vmem:[#allocation7 + $0x5c] sm:$0xf]
    %v390 = vld [vmem:[#allocation7 + $0x60] sm:$0xf]
    %v391 = vld [vmem:[#allocation7 + $0x64] sm:$0xf]
    %v392 = vld [vmem:[#allocation7 + $0x68] sm:$0xf]
    %v393 = vld [vmem:[#allocation7 + $0x6c] sm:$0xf]
    %v394 = vld [vmem:[#allocation7 + $0x70] sm:$0xf]
    %v395 = vld [vmem:[#allocation7 + $0x74] sm:$0xf]
    %v396 = vld [vmem:[#allocation7 + $0x78] sm:$0xf]
    %v397 = vld [vmem:[#allocation7 + $0x7c] sm:$0xf]
    %v398 = vld [vmem:[#allocation7 + $0x80] sm:$0xf]
    %v399 = vld [vmem:[#allocation7 + $0x84] sm:$0xf]
    %v400 = vld [vmem:[#allocation7 + $0x88] sm:$0xf]
    %v401 = vld [vmem:[#allocation7 + $0x8c] sm:$0xf]
    %v402 = vld [vmem:[#allocation7 + $0x90] sm:$0xf]
    %v403 = vld [vmem:[#allocation7 + $0x94] sm:$0xf]
    %v404 = vld [vmem:[#allocation7 + $0x98] sm:$0xf]
    %v405 = vld [vmem:[#allocation7 + $0x9c] sm:$0xf]
    %v406 = vld [vmem:[#allocation7 + $0xa0] sm:$0xf]
    %v407 = vld [vmem:[#allocation7 + $0xa4] sm:$0xf]
    %v408 = vld [vmem:[#allocation7 + $0xa8] sm:$0xf]
    %v409 = vld [vmem:[#allocation7 + $0xac] sm:$0xf]
    %v410 = vld [vmem:[#allocation7 + $0xb0] sm:$0xf]
    %v411 = vld [vmem:[#allocation7 + $0xb4] sm:$0xf]
    %v412 = vld [vmem:[#allocation7 + $0xb8] sm:$0xf]
    %v413 = vld [vmem:[#allocation7 + $0xbc] sm:$0xf]
    %v414 = vld [vmem:[#allocation7 + $0xc0] sm:$0xf]
    %v415 = vld [vmem:[#allocation7 + $0xc4] sm:$0xf]
    %v416 = vld [vmem:[#allocation7 + $0xc8] sm:$0xf]
    %v417 = vld [vmem:[#allocation7 + $0xcc] sm:$0xf]
    %v418 = vld [vmem:[#allocation7 + $0xd0] sm:$0xf]
    %v419 = vld [vmem:[#allocation7 + $0xd4] sm:$0xf]
    %v420 = vld [vmem:[#allocation7 + $0xd8] sm:$0xf]
    %v421 = vld [vmem:[#allocation7 + $0xdc] sm:$0xf]
    %v422 = vld [vmem:[#allocation7 + $0xe0] sm:$0xf]
    %v423 = vld [vmem:[#allocation7 + $0xe4] sm:$0xf]
    %v424 = vld [vmem:[#allocation7 + $0xe8] sm:$0xf]
    %v425 = vld [vmem:[#allocation7 + $0xec] sm:$0xf]
    %v426 = vld [vmem:[#allocation7 + $0xf0] sm:$0xf]
    %v427 = vld [vmem:[#allocation7 + $0xf4] sm:$0xf]
    %v428 = vld [vmem:[#allocation7 + $0xf8] sm:$0xf]
    %v429 = vld [vmem:[#allocation7 + $0xfc] sm:$0xf]
    %v430 = vld [vmem:[%s4] sm:$0x1]
    %v432 = vlaneseq
    %v433 = vshrl.u32 %v432, 7
    %v434 = vsub.s32 0, %v433
    %v435 = vrot.slane %v430, %v434
    %v501 = vunpack.c.l.b16 %v366
    %v502 = vunpack.c.l.b16 %v367
    %v503 = vunpack.c.l.b16 %v368
    %v504 = vunpack.c.l.b16 %v369
    %v505 = vunpack.c.l.b16 %v370
    %v506 = vunpack.c.l.b16 %v371
    %v507 = vunpack.c.l.b16 %v372
    %v508 = vunpack.c.l.b16 %v373
    %v509 = vunpack.c.l.b16 %v374
    %v510 = vunpack.c.l.b16 %v375
    %v511 = vunpack.c.l.b16 %v376
    %v512 = vunpack.c.l.b16 %v377
    %v513 = vunpack.c.l.b16 %v378
    %v514 = vunpack.c.l.b16 %v379
    %v515 = vunpack.c.l.b16 %v380
    %v516 = vunpack.c.l.b16 %v381
    %v517 = vunpack.c.l.b16 %v382
    %v518 = vunpack.c.l.b16 %v383
    %v519 = vunpack.c.l.b16 %v384
    %v520 = vunpack.c.l.b16 %v385
    %v521 = vunpack.c.l.b16 %v386
    %v522 = vunpack.c.l.b16 %v387
    %v523 = vunpack.c.l.b16 %v388
    %v524 = vunpack.c.l.b16 %v389
    %v525 = vunpack.c.l.b16 %v390
    %v526 = vunpack.c.l.b16 %v391
    %v527 = vunpack.c.l.b16 %v392
    %v528 = vunpack.c.l.b16 %v393
    %v529 = vunpack.c.l.b16 %v394
    %v530 = vunpack.c.l.b16 %v395
    %v531 = vunpack.c.l.b16 %v396
    %v532 = vunpack.c.l.b16 %v397
    %v533 = vunpack.c.l.b16 %v398
    %v534 = vunpack.c.l.b16 %v399
    %v535 = vunpack.c.l.b16 %v400
    %v536 = vunpack.c.l.b16 %v401
    %v537 = vunpack.c.l.b16 %v402
    %v538 = vunpack.c.l.b16 %v403
    %v539 = vunpack.c.l.b16 %v404
    %v540 = vunpack.c.l.b16 %v405
    %v541 = vunpack.c.l.b16 %v406
    %v542 = vunpack.c.l.b16 %v407
    %v543 = vunpack.c.l.b16 %v408
    %v544 = vunpack.c.l.b16 %v409
    %v545 = vunpack.c.l.b16 %v410
    %v546 = vunpack.c.l.b16 %v411
    %v547 = vunpack.c.l.b16 %v412
    %v548 = vunpack.c.l.b16 %v413
    %v549 = vunpack.c.l.b16 %v414
    %v550 = vunpack.c.l.b16 %v415
    %v551 = vunpack.c.l.b16 %v416
    %v552 = vunpack.c.l.b16 %v417
    %v553 = vunpack.c.l.b16 %v418
    %v554 = vunpack.c.l.b16 %v419
    %v555 = vunpack.c.l.b16 %v420
    %v556 = vunpack.c.l.b16 %v421
    %v557 = vunpack.c.l.b16 %v422
    %v558 = vunpack.c.l.b16 %v423
    %v559 = vunpack.c.l.b16 %v424
    %v560 = vunpack.c.l.b16 %v425
    %v561 = vunpack.c.l.b16 %v426
    %v562 = vunpack.c.l.b16 %v427
    %v563 = vunpack.c.l.b16 %v428
    %v564 = vunpack.c.l.b16 %v429
    %v565 = vpack.c.b16 %v502, %v501
    %v566 = vpack.c.b16 %v504, %v503
    %v567 = vpack.c.b16 %v506, %v505
    %v568 = vpack.c.b16 %v508, %v507
    %v569 = vpack.c.b16 %v510, %v509
    %v570 = vpack.c.b16 %v512, %v511
    %v571 = vpack.c.b16 %v514, %v513
    %v572 = vpack.c.b16 %v516, %v515
    %v573 = vpack.c.b16 %v518, %v517
    %v574 = vpack.c.b16 %v520, %v519
    %v575 = vpack.c.b16 %v522, %v521
    %v576 = vpack.c.b16 %v524, %v523
    %v577 = vpack.c.b16 %v526, %v525
    %v578 = vpack.c.b16 %v528, %v527
    %v579 = vpack.c.b16 %v530, %v529
    %v580 = vpack.c.b16 %v532, %v531
    %v581 = vpack.c.b16 %v534, %v533
    %v582 = vpack.c.b16 %v536, %v535
    %v583 = vpack.c.b16 %v538, %v537
    %v584 = vpack.c.b16 %v540, %v539
    %v585 = vpack.c.b16 %v542, %v541
    %v586 = vpack.c.b16 %v544, %v543
    %v587 = vpack.c.b16 %v546, %v545
    %v588 = vpack.c.b16 %v548, %v547
    %v589 = vpack.c.b16 %v550, %v549
    %v590 = vpack.c.b16 %v552, %v551
    %v591 = vpack.c.b16 %v554, %v553
    %v592 = vpack.c.b16 %v556, %v555
    %v593 = vpack.c.b16 %v558, %v557
    %v594 = vpack.c.b16 %v560, %v559
    %v595 = vpack.c.b16 %v562, %v561
    %v596 = vpack.c.b16 %v564, %v563
    %629 = vmatprep.subr.bf16.mxu0 0
    %630 = vmatpush1.bf16.msra.mxu0 %v565
    %631 = vmatprep.subr.bf16.mxu0 0
    %632 = vmatpush1.bf16.msra.mxu0 %v566
    %633 = vmatprep.subr.bf16.mxu0 0
    %634 = vmatpush1.bf16.msra.mxu0 %v567
    %635 = vmatprep.subr.bf16.mxu0 0
    %636 = vmatpush1.bf16.msra.mxu0 %v568
    %637 = vmatprep.subr.bf16.mxu0 0
    %638 = vmatpush1.bf16.msra.mxu0 %v569
    %639 = vmatprep.subr.bf16.mxu0 0
    %640 = vmatpush1.bf16.msra.mxu0 %v570
    %641 = vmatprep.subr.bf16.mxu0 0
    %642 = vmatpush1.bf16.msra.mxu0 %v571
    %643 = vmatprep.subr.bf16.mxu0 0
    %644 = vmatpush1.bf16.msra.mxu0 %v572
    %645 = vmatprep.subr.bf16.mxu0 0
    %646 = vmatpush1.bf16.msra.mxu0 %v573
    %647 = vmatprep.subr.bf16.mxu0 0
    %648 = vmatpush1.bf16.msra.mxu0 %v574
    %649 = vmatprep.subr.bf16.mxu0 0
    %650 = vmatpush1.bf16.msra.mxu0 %v575
    %651 = vmatprep.subr.bf16.mxu0 0
    %652 = vmatpush1.bf16.msra.mxu0 %v576
    %653 = vmatprep.subr.bf16.mxu0 0
    %654 = vmatpush1.bf16.msra.mxu0 %v577
    %655 = vmatprep.subr.bf16.mxu0 0
    %656 = vmatpush1.bf16.msra.mxu0 %v578
    %657 = vmatprep.subr.bf16.mxu0 0
    %658 = vmatpush1.bf16.msra.mxu0 %v579
    %659 = vmatprep.subr.bf16.mxu0 0
    %660 = vmatpush1.bf16.msra.mxu0 %v580
    %661 = vmatprep.mubr.bf16.mxu0 %v363
    %662 = vmatmul.mubr.bf16.gmra.mrb[0].mxu0 %v362
    %v663 = vpop.f32.mrb[0].mxu0
    %v664 = vadd.f32 %v435, %v663
    %v665 = vpop.f32.mrb[0].mxu0
    %v666 = vpop.f32.mrb[0].mxu0
    %v667 = vpop.f32.mrb[0].mxu0
    %668 = vdwg.mxu0
    %669 = vmatprep.subr.bf16.mxu0 0
    %670 = vmatpush1.bf16.msra.mxu0 %v581
    %671 = vmatprep.subr.bf16.mxu0 0
    %672 = vmatpush1.bf16.msra.mxu0 %v582
    %673 = vmatprep.subr.bf16.mxu0 0
    %674 = vmatpush1.bf16.msra.mxu0 %v583
    %675 = vmatprep.subr.bf16.mxu0 0
    %676 = vmatpush1.bf16.msra.mxu0 %v584
    %677 = vmatprep.subr.bf16.mxu0 0
    %678 = vmatpush1.bf16.msra.mxu0 %v585
    %679 = vmatprep.subr.bf16.mxu0 0
    %680 = vmatpush1.bf16.msra.mxu0 %v586
    %681 = vmatprep.subr.bf16.mxu0 0
    %682 = vmatpush1.bf16.msra.mxu0 %v587
    %683 = vmatprep.subr.bf16.mxu0 0
    %684 = vmatpush1.bf16.msra.mxu0 %v588
    %685 = vmatprep.subr.bf16.mxu0 0
    %686 = vmatpush1.bf16.msra.mxu0 %v589
    %687 = vmatprep.subr.bf16.mxu0 0
    %688 = vmatpush1.bf16.msra.mxu0 %v590
    %689 = vmatprep.subr.bf16.mxu0 0
    %690 = vmatpush1.bf16.msra.mxu0 %v591
    %691 = vmatprep.subr.bf16.mxu0 0
    %692 = vmatpush1.bf16.msra.mxu0 %v592
    %693 = vmatprep.subr.bf16.mxu0 0
    %694 = vmatpush1.bf16.msra.mxu0 %v593
    %695 = vmatprep.subr.bf16.mxu0 0
    %696 = vmatpush1.bf16.msra.mxu0 %v594
    %697 = vmatprep.subr.bf16.mxu0 0
    %698 = vmatpush1.bf16.msra.mxu0 %v595
    %699 = vmatprep.subr.bf16.mxu0 0
    %700 = vmatpush1.bf16.msra.mxu0 %v596
    %701 = vmatprep.mubr.bf16.mxu0 %v365
    %702 = vmatmul.mubr.bf16.gmra.mrb[0].mxu0 %v364
    %v703 = vpop.f32.mrb[0].mxu0
    %v704 = vadd.f32 %v664, %v703
    %v705 = vpop.f32.mrb[0].mxu0
    %v706 = vpop.f32.mrb[0].mxu0
    %v707 = vpop.f32.mrb[0].mxu0
    %708 = vdwg.mxu0
    %709 = vst [vmem:[#allocation8] sm:$0xff] %v704
    // Predicated region
    $region34: #{tpu_custom_call.1} parent=1 // pred_check
      _
    $region35: #{tpu_custom_call.1} parent=1 // pred_check_branch
      %711 = sbr.rel (0) target = $region37
    $region36: #{tpu_custom_call.1} parent=1 // pred_region
      %s713 = ssub.s32 128, 128
      %714 = vsyncadd [#allocation4], %s713
      %s716 = sshll.u32 [#allocation8], 4
      %s717 = int_to_ptr.vmem [resolvable:$true] %s716
      %719 = dma.vmem_to_hbm [thread:$0]  %s717, 128, %s5, [#allocation4]
    $region37: #{tpu_custom_call.1} parent=1 // pred_fallthru
      _
    // Predicated region
    $region38: #{tpu_custom_call.1} parent=1 // pred_check
      _
    $region39: #{tpu_custom_call.1} parent=1 // pred_check_branch
      %721 = sbr.rel (0) target = $region41
    $region40: #{tpu_custom_call.1} parent=1 // pred_region
      %722 = dma.done [#allocation4], 128
    $region41: #{tpu_custom_call.1} parent=1 // pred_fallthru
      _
    %723 = vsyncpa [#allocation3], 1
    %724 = vsyncpa [#allocation6], 1
    %725 = vsyncpa [#allocation4], 1

</llo_original>
